<compile_context>
chip_gen: v7x
topology: tpu7x:2x2x1
jax: 0.10.0
libtpu: 0.0.40
codegen_flags: <defaults>
</compile_context>

<pallas_src>
import functools

import jax
import jax.numpy as jnp
from jax.experimental import pallas as pl
from jax.experimental.pallas import tpu as pltpu

HIDDEN = 128
LANES = 128


def _round_up(x, m):
    return ((x + m - 1) // m) * m


def _round_down(x, m):
    return (x // m) * m


# ---------------------------------------------------------------------------
# Kernel
# ---------------------------------------------------------------------------
def _critic_kernel(x_ref, w1_ref, b1_ref, w2_ref, b2_ref, o_ref, *, lane_dense):
    # Layer 1: (TB, D) @ (D, 128) on the MXU, f32 accumulation; bias + ReLU on the VPU.
    h = jnp.dot(x_ref[...], w1_ref[...], preferred_element_type=jnp.float32)
    h = jnp.maximum(h + b1_ref[...], 0.0)

    # Layer 2: VPU multiply with the (1, 128) w2 row + 128-lane reduction (XLU),
    # instead of an N=1 MXU matmul.
    p = h * w2_ref[...]
    b2 = b2_ref[0, 0]

    if lane_dense:
        # Lane-dense epilogue: pack the TB per-example values into a (TB//128, 128)
        # slab so the store path issues full-width vst instead of TB/8 masked vst.
        v = jnp.sum(p, axis=-1)                       # (TB,)
        o_ref[...] = (v + b2).reshape(o_ref.shape).astype(o_ref.dtype)
    else:
        # Lane-sparse fallback: (TB, 1) column (used for very large D or if the
        # sublane->lane reshape is unsupported by the installed Mosaic).
        v = jnp.sum(p, axis=-1, keepdims=True)        # (TB, 1)
        o_ref[...] = (v + b2).astype(o_ref.dtype)


# ---------------------------------------------------------------------------
# Sizing helpers
# ---------------------------------------------------------------------------
def _vmem_budget_bytes():
    """Usable VMEM budget with headroom for Mosaic's internal scratch."""
    cap = 64 << 20  # conservative default: v7x has 64 MiB VMEM per TensorCore
    try:
        cap = int(pltpu.get_tpu_info().vmem_capacity_bytes)
    except Exception:
        pass
    # v7x (64 MiB)  -> ~51 MiB budget; v5e/v6e (128 MiB) -> ~102 MiB budget.
    return max(16 << 20, min(cap - (12 << 20), int(cap * 0.8)))


def _choose_tiling(B, D, xbytes, budget, lane_dense_ok, max_block_b):
    """Pick the batch tile TB (and output layout) so the working set provably fits."""
    # Per-row working set: 2x double-buffered x rows + f32 hidden row + 2x out rows.
    per_row = 2 * D * xbytes + HIDDEN * 4 + 2 * 4
    # Resident operands (w1, b1, w2 row) + slack for compiler internals.
    fixed = D * HIDDEN * xbytes + 16 * HIDDEN * 4 + (4 << 20)
    tb_fit = max(8, (budget - fixed) // per_row)

    # Target ~4 MiB x tiles (>= 1-2 MiB keeps the DMA near the HBM roofline).
    tb_want = _round_up((4 << 20) // max(1, D * xbytes), 1024)
    tb = max(8, min(max(tb_want, 1024), tb_fit))
    if max_block_b is not None:
        tb = max(8, min(tb, int(max_block_b)))

    if lane_dense_ok:
        if B <= tb:
            # Single grid step: TB only needs to be a multiple of 128 so the
            # (TB//128, 128) output block equals the full output array.
            tb_s = _round_up(B, LANES)
            if tb_s <= tb_fit:
                return tb_s, True
        elif tb >= 1024:
            # Multi-step: TB must be a multiple of 1024 so the slab block keeps
            # its sublane dim a multiple of 8.
            return _round_down(tb, 1024), True

    # Lane-sparse (TB, 1) output path.
    tb = _round_down(min(tb, _round_up(B, 8)), 8)
    return max(tb, 8), False


# ---------------------------------------------------------------------------
# pallas_call construction
# ---------------------------------------------------------------------------
def _make_call(B, D, tb, lane_dense, vmem_limit, cost):
    grid = (pl.cdiv(B, tb),)

    if lane_dense:
        rows = grid[0] * (tb // LANES)
        out_shape = jax.ShapeDtypeStruct((rows, LANES), jnp.float32)
        out_spec = pl.BlockSpec((tb // LANES, LANES), lambda i: (i, 0))
    else:
        out_shape = jax.ShapeDtypeStruct((B, 1), jnp.float32)
        out_spec = pl.BlockSpec((tb, 1), lambda i: (i, 0))

    kernel = functools.partial(_critic_kernel, lane_dense=lane_dense)

    return pl.pallas_call(
        kernel,
        out_shape=out_shape,
        grid=grid,
        in_specs=[
            pl.BlockSpec((tb, D), lambda i: (i, 0)),            # x: streamed per step
            pl.BlockSpec((D, HIDDEN), lambda i: (0, 0)),        # w1: VMEM-resident
            pl.BlockSpec((1, HIDDEN), lambda i: (0, 0)),        # b1: VMEM-resident row
            pl.BlockSpec((1, HIDDEN), lambda i: (0, 0)),        # w2 row: VMEM-resident
            pl.BlockSpec(memory_space=pltpu.MemorySpace.SMEM),  # b2: scalar in SMEM
        ],
        out_specs=out_spec,
        compiler_params=pltpu.CompilerParams(
            dimension_semantics=("parallel",),
            vmem_limit_bytes=int(vmem_limit),
        ),
        cost_estimate=cost,
    )


_LANE_DENSE_OK = None


def _lane_dense_supported():
    """One-time probe: does the installed Mosaic lower the slab (sublane->lane) epilogue?"""
    global _LANE_DENSE_OK
    if _LANE_DENSE_OK is None:
        try:
            B, D, tb = 256, 32, 256
            x = jnp.zeros((B, D), jnp.float32)
            w1 = jnp.zeros((D, HIDDEN), jnp.float32)
            b1 = jnp.zeros((1, HIDDEN), jnp.float32)
            w2r = jnp.zeros((1, HIDDEN), jnp.float32)
            b2 = jnp.zeros((1, 1), jnp.float32)
            call = _make_call(B, D, tb, True, 32 << 20, None)
            jax.block_until_ready(call(x, w1, b1, w2r, b2))
            _LANE_DENSE_OK = True
        except Exception:
            _LANE_DENSE_OK = False
    return _LANE_DENSE_OK


# ---------------------------------------------------------------------------
# Public forward
# ---------------------------------------------------------------------------
def critic_forward(state, w1, b1, w2, b2, *, max_block_b=None, compute_dtype=None,
                   lane_dense=None):
    """Forward pass of Critic: ReLU(state @ w1 + b1) @ w2 + b2, returns (B, 1) f32.

    compute_dtype=jnp.bfloat16 casts state/w1 in the wrapper so the dominant HBM
    stream is half-width (recommended on v5e); the default (None) keeps f32 and
    matches the PyTorch reference bit-for-bit within f32 matmul tolerance.
    """
    B, D = state.shape
    assert w1.shape == (D, HIDDEN) and b1.shape == (1, HIDDEN)
    assert w2.shape == (HIDDEN, 1) and b2.shape == (1, 1)

    if compute_dtype is not None and state.dtype != jnp.dtype(compute_dtype):
        # Cast in the wrapper (not in the kernel) so the HBM x stream is narrow.
        state = state.astype(compute_dtype)
        w1 = w1.astype(compute_dtype)
    xbytes = state.dtype.itemsize

    if lane_dense is None:
        lane_dense = _lane_dense_supported()

    budget = _vmem_budget_bytes()
    tb, lane_dense = _choose_tiling(B, D, xbytes, budget, bool(lane_dense), max_block_b)

    # Small operands kept in f32: bias add / layer 2 happen in f32 after the MXU.
    w2_row = w2.reshape(1, HIDDEN).astype(jnp.float32)
    b1f = b1.astype(jnp.float32)
    b2f = b2.astype(jnp.float32)

    cost = pl.CostEstimate(
        flops=int(2 * B * D * HIDDEN + 4 * B * HIDDEN),
        transcendentals=0,
        bytes_accessed=int(B * D * xbytes + D * HIDDEN * xbytes + B * 4 + 3 * HIDDEN * 4),
    )

    call = _make_call(B, D, tb, lane_dense, budget, cost)
    out = call(state, w1, b1f, w2_row, b2f)

    if lane_dense:
        # Unpack the (rows, 128) slab back to (B, 1); rows beyond B are garbage from
        # the ragged last block and are dropped here.
        out = out.reshape(-1)[:B].reshape(B, 1)
    return out


# ---------------------------------------------------------------------------
# Init / reference
# ---------------------------------------------------------------------------
def init_params(key, input_dim):
    """Deterministic init mirroring nn.Linear's U(-1/sqrt(fan_in), 1/sqrt(fan_in))."""
    k1, k2, k3, k4 = jax.random.split(key, 4)
    bound1 = 1.0 / jnp.sqrt(jnp.float32(input_dim))
    bound2 = 1.0 / jnp.sqrt(jnp.float32(HIDDEN))
    w1 = jax.random.uniform(k1, (input_dim, HIDDEN), jnp.float32, -bound1, bound1)
    b1 = jax.random.uniform(k2, (1, HIDDEN), jnp.float32, -bound1, bound1)
    w2 = jax.random.uniform(k3, (HIDDEN, 1), jnp.float32, -bound2, bound2)
    b2 = jax.random.uniform(k4, (1, 1), jnp.float32, -bound2, bound2)
    return w1, b1, w2, b2


def _reference(state, w1, b1, w2, b2):
    return jnp.maximum(state @ w1 + b1, 0.0) @ w2 + b2


if __name__ == "__main__":
    key = jax.random.PRNGKey(0)
    k1, k2, k3, kp = jax.random.split(key, 4)

    INPUT_DIM = 32
    w1, b1, w2, b2 = init_params(kp, INPUT_DIM)

    # (1) Small batch matching the module's forward contract (single grid step).
    B = 8
    state = jax.random.normal(k1, (B, INPUT_DIM), jnp.float32)
    out = jax.block_until_ready(critic_forward(state, w1, b1, w2, b2))
    ref = _reference(state, w1, b1, w2, b2)
    assert out.shape == (B, 1)
    assert jnp.allclose(out, ref, atol=1e-5, rtol=1e-5)

    # (2) Multi-step grid with a ragged last block (no wrapper-side padding).
    B2 = 2500
    state2 = jax.random.normal(k2, (B2, INPUT_DIM), jnp.float32)
    out2 = jax.block_until_ready(critic_forward(state2, w1, b1, w2, b2, max_block_b=1024))
    ref2 = _reference(state2, w1, b1, w2, b2)
    assert out2.shape == (B2, 1)
    assert jnp.allclose(out2, ref2, atol=1e-5, rtol=1e-5)

    # (3) Lane-sparse (TB, 1) output fallback path, ragged + multi-step.
    B3 = 200
    state3 = jax.random.normal(k3, (B3, INPUT_DIM), jnp.float32)
    out3 = jax.block_until_ready(
        critic_forward(state3, w1, b1, w2, b2, max_block_b=64, lane_dense=False))
    ref3 = _reference(state3, w1, b1, w2, b2)
    assert out3.shape == (B3, 1)
    assert jnp.allclose(out3, ref3, atol=1e-5, rtol=1e-5)

    print("KERNEL_OK")
</pallas_src>

<mosaic_0001>
module attributes {stable_mosaic.version = 11 : i64} {
  func.func @_critic_kernel(%arg0: i32, %arg1: memref<256x32xf32, #tpu.memory_space<vmem>>, %arg2: memref<32x128xf32, #tpu.memory_space<vmem>>, %arg3: memref<1x128xf32, #tpu.memory_space<vmem>>, %arg4: memref<1x128xf32, #tpu.memory_space<vmem>>, %arg5: memref<1x1xf32, #tpu.memory_space<smem>>, %arg6: memref<2x128xf32, #tpu.memory_space<vmem>>) attributes {dimension_semantics = [#tpu.dimension_semantics<parallel>], iteration_bounds = array<i64: 1>, scalar_prefetch = 0 : i64, scratch_operands = 0 : i64, tpu.core_type = #tpu.core_type<tc>, window_params = [{transform_indices = @transform_0, window_bounds = array<i64: 256, 32>}, {pipeline_mode = #tpu.pipeline_mode<synchronous>, transform_indices = @transform_1, window_bounds = array<i64: 32, 128>}, {pipeline_mode = #tpu.pipeline_mode<synchronous>, transform_indices = @transform_2, window_bounds = array<i64: 1, 128>}, {pipeline_mode = #tpu.pipeline_mode<synchronous>, transform_indices = @transform_3, window_bounds = array<i64: 1, 128>}, {transform_indices = @transform_4, window_bounds = array<i64: 1, 1>}, {transform_indices = @transform_5, window_bounds = array<i64: 2, 128>}]} {
    %c0 = arith.constant 0 : index
    %c0_0 = arith.constant 0 : index
    %0 = vector.load %arg1[%c0, %c0_0] : memref<256x32xf32, #tpu.memory_space<vmem>>, vector<256x32xf32>
    %c0_1 = arith.constant 0 : index
    %c0_2 = arith.constant 0 : index
    %1 = vector.load %arg2[%c0_1, %c0_2] : memref<32x128xf32, #tpu.memory_space<vmem>>, vector<32x128xf32>
    %cst = arith.constant dense<0.000000e+00> : vector<256x128xf32>
    %2 = tpu.matmul %0, %1, %cst {dimension_numbers = #tpu.dot_dimension_numbers<[1], [0], [0], [1], [0, 0, 1, 1], [], []>} : vector<256x32xf32>, vector<32x128xf32>, vector<256x128xf32> -> vector<256x128xf32>
    %c0_3 = arith.constant 0 : index
    %c0_4 = arith.constant 0 : index
    %3 = vector.load %arg3[%c0_3, %c0_4] : memref<1x128xf32, #tpu.memory_space<vmem>>, vector<1x128xf32>
    %4 = vector.broadcast %3 : vector<1x128xf32> to vector<256x128xf32>
    %5 = arith.addf %2, %4 : vector<256x128xf32>
    %cst_5 = arith.constant 0.000000e+00 : f32
    %6 = vector.broadcast %cst_5 : f32 to vector<256x128xf32>
    %7 = arith.maximumf %5, %6 : vector<256x128xf32>
    %c0_6 = arith.constant 0 : index
    %c0_7 = arith.constant 0 : index
    %8 = vector.load %arg4[%c0_6, %c0_7] : memref<1x128xf32, #tpu.memory_space<vmem>>, vector<1x128xf32>
    %9 = vector.broadcast %8 : vector<1x128xf32> to vector<256x128xf32>
    %10 = arith.mulf %7, %9 : vector<256x128xf32>
    %c0_8 = arith.constant 0 : index
    %c0_9 = arith.constant 0 : index
    %11 = memref.load %arg5[%c0_8, %c0_9] : memref<1x1xf32, #tpu.memory_space<smem>>
    %cst_10 = arith.constant dense<0.000000e+00> : vector<256xf32>
    %12 = vector.multi_reduction <add>, %10, %cst_10 [1] : vector<256x128xf32> to vector<256xf32>
    %13 = vector.broadcast %11 : f32 to vector<256xf32>
    %14 = arith.addf %12, %13 : vector<256xf32>
    %15 = vector.shape_cast %14 : vector<256xf32> to vector<2x128xf32>
    %c0_11 = arith.constant 0 : index
    %c0_12 = arith.constant 0 : index
    %16 = vector.load %arg6[%c0_11, %c0_12] : memref<2x128xf32, #tpu.memory_space<vmem>>, vector<2x128xf32>
    tpu.vector_store %arg6[%c0_11, %c0_12], %15 {strides = array<i32>} : memref<2x128xf32, #tpu.memory_space<vmem>>, vector<2x128xf32>,
    return
  }
  func.func @transform_0(%arg0: i32) -> (i32, i32) {
    %c0_i32 = arith.constant 0 : i32
    %c0_i32_0 = arith.constant 0 : i32
    return %arg0, %c0_i32 : i32, i32
  }
  func.func @transform_1(%arg0: i32) -> (i32, i32) {
    %c0_i32 = arith.constant 0 : i32
    %c0_i32_0 = arith.constant 0 : i32
    %c0_i32_1 = arith.constant 0 : i32
    return %c0_i32, %c0_i32_0 : i32, i32
  }
  func.func @transform_2(%arg0: i32) -> (i32, i32) {
    %c0_i32 = arith.constant 0 : i32
    %c0_i32_0 = arith.constant 0 : i32
    %c0_i32_1 = arith.constant 0 : i32
    return %c0_i32, %c0_i32_0 : i32, i32
  }
  func.func @transform_3(%arg0: i32) -> (i32, i32) {
    %c0_i32 = arith.constant 0 : i32
    %c0_i32_0 = arith.constant 0 : i32
    %c0_i32_1 = arith.constant 0 : i32
    return %c0_i32, %c0_i32_0 : i32, i32
  }
  func.func @transform_4(%arg0: i32) -> (i32, i32) {
    %c0_i32 = arith.constant 0 : i32
    %c0_i32_0 = arith.constant 0 : i32
    %c0_i32_1 = arith.constant 0 : i32
    return %c0_i32, %c0_i32_0 : i32, i32
  }
  func.func @transform_5(%arg0: i32) -> (i32, i32) {
    %c0_i32 = arith.constant 0 : i32
    %c0_i32_0 = arith.constant 0 : i32
    return %arg0, %c0_i32 : i32, i32
  }
}

module attributes {stable_mosaic.version = 11 : i64} {
  func.func @_critic_kernel(%arg0: i32, %arg1: memref<8x32xf32, #tpu.memory_space<vmem>>, %arg2: memref<32x128xf32, #tpu.memory_space<vmem>>, %arg3: memref<1x128xf32, #tpu.memory_space<vmem>>, %arg4: memref<1x128xf32, #tpu.memory_space<vmem>>, %arg5: memref<1x1xf32, #tpu.memory_space<smem>>, %arg6: memref<8x1xf32, #tpu.memory_space<vmem>>) attributes {dimension_semantics = [#tpu.dimension_semantics<parallel>], iteration_bounds = array<i64: 1>, scalar_prefetch = 0 : i64, scratch_operands = 0 : i64, tpu.core_type = #tpu.core_type<tc>, window_params = [{transform_indices = @transform_0, window_bounds = array<i64: 8, 32>}, {pipeline_mode = #tpu.pipeline_mode<synchronous>, transform_indices = @transform_1, window_bounds = array<i64: 32, 128>}, {pipeline_mode = #tpu.pipeline_mode<synchronous>, transform_indices = @transform_2, window_bounds = array<i64: 1, 128>}, {pipeline_mode = #tpu.pipeline_mode<synchronous>, transform_indices = @transform_3, window_bounds = array<i64: 1, 128>}, {transform_indices = @transform_4, window_bounds = array<i64: 1, 1>}, {transform_indices = @transform_5, window_bounds = array<i64: 8, 1>}]} {
    %c0 = arith.constant 0 : index
    %c0_0 = arith.constant 0 : index
    %0 = vector.load %arg1[%c0, %c0_0] : memref<8x32xf32, #tpu.memory_space<vmem>>, vector<8x32xf32>
    %c0_1 = arith.constant 0 : index
    %c0_2 = arith.constant 0 : index
    %1 = vector.load %arg2[%c0_1, %c0_2] : memref<32x128xf32, #tpu.memory_space<vmem>>, vector<32x128xf32>
    %cst = arith.constant dense<0.000000e+00> : vector<8x128xf32>
    %2 = tpu.matmul %0, %1, %cst {dimension_numbers = #tpu.dot_dimension_numbers<[1], [0], [0], [1], [0, 0, 1, 1], [], []>} : vector<8x32xf32>, vector<32x128xf32>, vector<8x128xf32> -> vector<8x128xf32>
    %c0_3 = arith.constant 0 : index
    %c0_4 = arith.constant 0 : index
    %3 = vector.load %arg3[%c0_3, %c0_4] : memref<1x128xf32, #tpu.memory_space<vmem>>, vector<1x128xf32>
    %4 = vector.broadcast %3 : vector<1x128xf32> to vector<8x128xf32>
    %5 = arith.addf %2, %4 : vector<8x128xf32>
    %cst_5 = arith.constant 0.000000e+00 : f32
    %6 = vector.broadcast %cst_5 : f32 to vector<8x128xf32>
    %7 = arith.maximumf %5, %6 : vector<8x128xf32>
    %c0_6 = arith.constant 0 : index
    %c0_7 = arith.constant 0 : index
    %8 = vector.load %arg4[%c0_6, %c0_7] : memref<1x128xf32, #tpu.memory_space<vmem>>, vector<1x128xf32>
    %9 = vector.broadcast %8 : vector<1x128xf32> to vector<8x128xf32>
    %10 = arith.mulf %7, %9 : vector<8x128xf32>
    %c0_8 = arith.constant 0 : index
    %c0_9 = arith.constant 0 : index
    %11 = memref.load %arg5[%c0_8, %c0_9] : memref<1x1xf32, #tpu.memory_space<smem>>
    %cst_10 = arith.constant dense<0.000000e+00> : vector<8xf32>
    %12 = vector.multi_reduction <add>, %10, %cst_10 [1] : vector<8x128xf32> to vector<8xf32>
    %13 = vector.shape_cast %12 : vector<8xf32> to vector<8x1xf32>
    %14 = vector.broadcast %11 : f32 to vector<8x1xf32>
    %15 = arith.addf %13, %14 : vector<8x1xf32>
    %c0_11 = arith.constant 0 : index
    %c0_12 = arith.constant 0 : index
    %16 = vector.load %arg6[%c0_11, %c0_12] : memref<8x1xf32, #tpu.memory_space<vmem>>, vector<8x1xf32>
    tpu.vector_store %arg6[%c0_11, %c0_12], %15 {strides = array<i32>} : memref<8x1xf32, #tpu.memory_space<vmem>>, vector<8x1xf32>,
    return
  }
  func.func @transform_0(%arg0: i32) -> (i32, i32) {
    %c0_i32 = arith.constant 0 : i32
    %c0_i32_0 = arith.constant 0 : i32
    return %arg0, %c0_i32 : i32, i32
  }
  func.func @transform_1(%arg0: i32) -> (i32, i32) {
    %c0_i32 = arith.constant 0 : i32
    %c0_i32_0 = arith.constant 0 : i32
    %c0_i32_1 = arith.constant 0 : i32
    return %c0_i32, %c0_i32_0 : i32, i32
  }
  func.func @transform_2(%arg0: i32) -> (i32, i32) {
    %c0_i32 = arith.constant 0 : i32
    %c0_i32_0 = arith.constant 0 : i32
    %c0_i32_1 = arith.constant 0 : i32
    return %c0_i32, %c0_i32_0 : i32, i32
  }
  func.func @transform_3(%arg0: i32) -> (i32, i32) {
    %c0_i32 = arith.constant 0 : i32
    %c0_i32_0 = arith.constant 0 : i32
    %c0_i32_1 = arith.constant 0 : i32
    return %c0_i32, %c0_i32_0 : i32, i32
  }
  func.func @transform_4(%arg0: i32) -> (i32, i32) {
    %c0_i32 = arith.constant 0 : i32
    %c0_i32_0 = arith.constant 0 : i32
    %c0_i32_1 = arith.constant 0 : i32
    return %c0_i32, %c0_i32_0 : i32, i32
  }
  func.func @transform_5(%arg0: i32) -> (i32, i32) {
    %c0_i32 = arith.constant 0 : i32
    %c0_i32_0 = arith.constant 0 : i32
    return %arg0, %c0_i32 : i32, i32
  }
}

</mosaic_0001>

<llo_original>
// kernel: tpu_custom_call.1
$region0: #{tpu_custom_call.1}
  #allocation0 [shape = 'u32[]', space=smem, size = 0x4, offset = 0x4, fixed_abs, tag = 'smem constant byte address 0x4 - core index']
  #allocation1 [shape = 'u32[144,128]{1,0:T(1,128)}', space=vmem, size = 0x12000, scoped, tag = 'internal scratch']
  #allocation2 [shape = 'f32[1,1]{1,0:T(1,128)S(6)}', space=smem, size = 0x200, scoped, tag = 'scoped memory for tpu_custom_call.1']
  %s0 = inlined_call_operand.vmem [shape: f32[256,32], index: 0, kind: input, shape index: {}]
  %s1 = inlined_call_operand.vmem [shape: f32[32,128], index: 1, kind: input, shape index: {}]
  %s2 = inlined_call_operand.vmem [shape: f32[1,128], index: 2, kind: input, shape index: {}]
  %s3 = inlined_call_operand.vmem [shape: f32[1,128], index: 3, kind: input, shape index: {}]
  %s4 = inlined_call_operand.<no memory space> [shape: f32[1,1], index: 4, kind: input, shape index: {}]
  %s5 = inlined_call_operand.hbm [shape: f32[2,128], index: 5, kind: output, shape index: {}]
  %s6 = sld [smem:[#allocation0]]
  $region30: #{tpu_custom_call.1} parent=0
    _
  %s8 = ssub.s32 1, %s6
  %s9 = scalar_select 0, %s8, %s6
  %10 = sst [smem:[#allocation2]] %s4
  $region1: #{tpu_custom_call.1} parent=0
    #allocation3 [shape = 'u8[1024]{0}', space=vmem, size = 0x400, scoped, tag = 'output window, operand 0, single buffered']
    #allocation4 [shape = 's32[1]{0}', space=sflag, size = 0x4, scoped, tag = 'scoped memory for tpu_custom_call.1']
    %11 = vsyncpa [#allocation4], 0
    // Predicated region
    $region2: #{tpu_custom_call.1} parent=1 // pred_check
      _
    $region3: #{tpu_custom_call.1} parent=1 // pred_check_branch
      %13 = sbr.rel (0) target = $region5
    $region4: #{tpu_custom_call.1} parent=1 // pred_region
      _
    $region5: #{tpu_custom_call.1} parent=1 // pred_fallthru
      _
    // Predicated region
    $region6: #{tpu_custom_call.1} parent=1 // pred_check
      _
    $region7: #{tpu_custom_call.1} parent=1 // pred_check_branch
      %15 = sbr.rel (0) target = $region9
    $region8: #{tpu_custom_call.1} parent=1 // pred_region
      _
    $region9: #{tpu_custom_call.1} parent=1 // pred_fallthru
      _
    // Predicated region
    $region10: #{tpu_custom_call.1} parent=1 // pred_check
      _
    $region11: #{tpu_custom_call.1} parent=1 // pred_check_branch
      %17 = sbr.rel (0) target = $region13
    $region12: #{tpu_custom_call.1} parent=1 // pred_region
      _
    $region13: #{tpu_custom_call.1} parent=1 // pred_fallthru
      _
    // Predicated region
    $region14: #{tpu_custom_call.1} parent=1 // pred_check
      _
    $region15: #{tpu_custom_call.1} parent=1 // pred_check_branch
      %19 = sbr.rel (0) target = $region17
    $region16: #{tpu_custom_call.1} parent=1 // pred_region
      _
    $region17: #{tpu_custom_call.1} parent=1 // pred_fallthru
      _
    // Predicated region
    $region18: #{tpu_custom_call.1} parent=1 // pred_check
      _
    $region19: #{tpu_custom_call.1} parent=1 // pred_check_branch
      %21 = sbr.rel (0) target = $region21
    $region20: #{tpu_custom_call.1} parent=1 // pred_region
      _
    $region21: #{tpu_custom_call.1} parent=1 // pred_fallthru
      _
    %v22 = vld [vmem:[%s0] sm:$0xff]
    %v23 = vld [vmem:[%s0 + $0x8] sm:$0xff]
    %v24 = vld [vmem:[%s0 + $0x10] sm:$0xff]
    %v25 = vld [vmem:[%s0 + $0x18] sm:$0xff]
    %v26 = vld [vmem:[%s0 + $0x20] sm:$0xff]
    %v27 = vld [vmem:[%s0 + $0x28] sm:$0xff]
    %v28 = vld [vmem:[%s0 + $0x30] sm:$0xff]
    %v29 = vld [vmem:[%s0 + $0x38] sm:$0xff]
    %v30 = vld [vmem:[%s0 + $0x40] sm:$0xff]
    %v31 = vld [vmem:[%s0 + $0x48] sm:$0xff]
    %v32 = vld [vmem:[%s0 + $0x50] sm:$0xff]
    %v33 = vld [vmem:[%s0 + $0x58] sm:$0xff]
    %v34 = vld [vmem:[%s0 + $0x60] sm:$0xff]
    %v35 = vld [vmem:[%s0 + $0x68] sm:$0xff]
    %v36 = vld [vmem:[%s0 + $0x70] sm:$0xff]
    %v37 = vld [vmem:[%s0 + $0x78] sm:$0xff]
    %v38 = vld [vmem:[%s0 + $0x80] sm:$0xff]
    %v39 = vld [vmem:[%s0 + $0x88] sm:$0xff]
    %v40 = vld [vmem:[%s0 + $0x90] sm:$0xff]
    %v41 = vld [vmem:[%s0 + $0x98] sm:$0xff]
    %v42 = vld [vmem:[%s0 + $0xa0] sm:$0xff]
    %v43 = vld [vmem:[%s0 + $0xa8] sm:$0xff]
    %v44 = vld [vmem:[%s0 + $0xb0] sm:$0xff]
    %v45 = vld [vmem:[%s0 + $0xb8] sm:$0xff]
    %v46 = vld [vmem:[%s0 + $0xc0] sm:$0xff]
    %v47 = vld [vmem:[%s0 + $0xc8] sm:$0xff]
    %v48 = vld [vmem:[%s0 + $0xd0] sm:$0xff]
    %v49 = vld [vmem:[%s0 + $0xd8] sm:$0xff]
    %v50 = vld [vmem:[%s0 + $0xe0] sm:$0xff]
    %v51 = vld [vmem:[%s0 + $0xe8] sm:$0xff]
    %v52 = vld [vmem:[%s0 + $0xf0] sm:$0xff]
    %v53 = vld [vmem:[%s0 + $0xf8] sm:$0xff]
    %v54 = vld [vmem:[%s1] sm:$0xff]
    %v55 = vld [vmem:[%s1 + $0x8] sm:$0xff]
    %v56 = vld [vmem:[%s1 + $0x10] sm:$0xff]
    %v57 = vld [vmem:[%s1 + $0x18] sm:$0xff]
    %v58 = vld [vmem:[%s2] sm:$0x1]
    %v60 = vlaneseq
    %v61 = vshrl.u32 %v60, 7
    %v62 = vsub.s32 0, %v61
    %v63 = vrot.slane %v58, %v62
    %vm65 = vcmask 261120
    %v67 = vsel %vm65, %v22, 0
    %v70 = vsel %vm65, %v23, 0
    %v73 = vsel %vm65, %v24, 0
    %v76 = vsel %vm65, %v25, 0
    %v79 = vsel %vm65, %v26, 0
    %v82 = vsel %vm65, %v27, 0
    %v85 = vsel %vm65, %v28, 0
    %v88 = vsel %vm65, %v29, 0
    %v91 = vsel %vm65, %v30, 0
    %v94 = vsel %vm65, %v31, 0
    %v97 = vsel %vm65, %v32, 0
    %v100 = vsel %vm65, %v33, 0
    %v103 = vsel %vm65, %v34, 0
    %v106 = vsel %vm65, %v35, 0
    %v109 = vsel %vm65, %v36, 0
    %v112 = vsel %vm65, %v37, 0
    %v115 = vsel %vm65, %v38, 0
    %v118 = vsel %vm65, %v39, 0
    %v121 = vsel %vm65, %v40, 0
    %v124 = vsel %vm65, %v41, 0
    %v127 = vsel %vm65, %v42, 0
    %v130 = vsel %vm65, %v43, 0
    %v133 = vsel %vm65, %v44, 0
    %v136 = vsel %vm65, %v45, 0
    %v139 = vsel %vm65, %v46, 0
    %v142 = vsel %vm65, %v47, 0
    %v145 = vsel %vm65, %v48, 0
    %v148 = vsel %vm65, %v49, 0
    %v151 = vsel %vm65, %v50, 0
    %v154 = vsel %vm65, %v51, 0
    %v157 = vsel %vm65, %v52, 0
    %v160 = vsel %vm65, %v53, 0
    %162 = vmatprep.subr.mxu0 0.0
    %163 = vmatpush1.msra.mxu0 %v54
    %164 = vmatprep.subr.mxu0 0.0
    %165 = vmatpush1.msra.mxu0 %v55
    %166 = vmatprep.subr.mxu0 0.0
    %167 = vmatpush1.msra.mxu0 %v56
    %168 = vmatprep.subr.mxu0 0.0
    %169 = vmatpush1.msra.mxu0 %v57
    %170 = vmatprep.subr.mxu0 0.0
    %171 = vmatpush1.msra.mxu0 0.0
    %172 = vmatprep.subr.mxu0 0.0
    %173 = vmatpush1.msra.mxu0 0.0
    %174 = vmatprep.subr.mxu0 0.0
    %175 = vmatpush1.msra.mxu0 0.0
    %176 = vmatprep.subr.mxu0 0.0
    %177 = vmatpush1.msra.mxu0 0.0
    %178 = vmatprep.subr.mxu0 0.0
    %179 = vmatpush1.msra.mxu0 0.0
    %180 = vmatprep.subr.mxu0 0.0
    %181 = vmatpush1.msra.mxu0 0.0
    %182 = vmatprep.subr.mxu0 0.0
    %183 = vmatpush1.msra.mxu0 0.0
    %184 = vmatprep.subr.mxu0 0.0
    %185 = vmatpush1.msra.mxu0 0.0
    %186 = vmatprep.subr.mxu0 0.0
    %187 = vmatpush1.msra.mxu0 0.0
    %188 = vmatprep.subr.mxu0 0.0
    %189 = vmatpush1.msra.mxu0 0.0
    %190 = vmatprep.subr.mxu0 0.0
    %191 = vmatpush1.msra.mxu0 0.0
    %192 = vmatprep.subr.mxu0 0.0
    %193 = vmatpush1.msra.mxu0 0.0
    %194 = vmatprep.subr.mxu0 0.0
    %195 = vmatpush1.msra.mxu0 0.0
    %196 = vmatprep.subr.mxu0 0.0
    %197 = vmatpush1.msra.mxu0 0.0
    %198 = vmatprep.subr.mxu0 0.0
    %199 = vmatpush1.msra.mxu0 0.0
    %200 = vmatprep.subr.mxu0 0.0
    %201 = vmatpush1.msra.mxu0 0.0
    %202 = vmatprep.subr.mxu0 0.0
    %203 = vmatpush1.msra.mxu0 0.0
    %204 = vmatprep.subr.mxu0 0.0
    %205 = vmatpush1.msra.mxu0 0.0
    %206 = vmatprep.subr.mxu0 0.0
    %207 = vmatpush1.msra.mxu0 0.0
    %208 = vmatprep.subr.mxu0 0.0
    %209 = vmatpush1.msra.mxu0 0.0
    %210 = vmatprep.subr.mxu0 0.0
    %211 = vmatpush1.msra.mxu0 0.0
    %212 = vmatprep.subr.mxu0 0.0
    %213 = vmatpush1.msra.mxu0 0.0
    %214 = vmatprep.subr.mxu0 0.0
    %215 = vmatpush1.msra.mxu0 0.0
    %216 = vmatprep.subr.mxu0 0.0
    %217 = vmatpush1.msra.mxu0 0.0
    %218 = vmatprep.subr.mxu0 0.0
    %219 = vmatpush1.msra.mxu0 0.0
    %220 = vmatprep.subr.mxu0 0.0
    %221 = vmatpush1.msra.mxu0 0.0
    %222 = vmatprep.subr.mxu0 0.0
    %223 = vmatpush1.msra.mxu0 0.0
    %224 = vmatprep.subr.mxu0 0.0
    %225 = vmatpush1.msra.mxu0 0.0
    %226 = vmatprep.mubr.f32.mxu0 0.0
    %227 = vmatmul.mubr.f32.gmra.mrb[0].mxu0 %v67
    %v228 = vpop.f32.mrb[0].mxu0
    %v229 = vadd.f32 %v63, %v228
    %v230 = vpop.f32.mrb[0].mxu0
    %231 = vmatprep.mubr.f32.mxu0 0.0
    %232 = vmatmul.mubr.f32.gmra.mrb[0].mxu0 %v70
    %v233 = vpop.f32.mrb[0].mxu0
    %v234 = vadd.f32 %v63, %v233
    %v235 = vpop.f32.mrb[0].mxu0
    %236 = vmatprep.mubr.f32.mxu0 0.0
    %237 = vmatmul.mubr.f32.gmra.mrb[0].mxu0 %v73
    %v238 = vpop.f32.mrb[0].mxu0
    %v239 = vadd.f32 %v63, %v238
    %v240 = vpop.f32.mrb[0].mxu0
    %241 = vmatprep.mubr.f32.mxu0 0.0
    %242 = vmatmul.mubr.f32.gmra.mrb[0].mxu0 %v76
    %v243 = vpop.f32.mrb[0].mxu0
    %v244 = vadd.f32 %v63, %v243
    %v245 = vpop.f32.mrb[0].mxu0
    %246 = vmatprep.mubr.f32.mxu0 0.0
    %247 = vmatmul.mubr.f32.gmra.mrb[0].mxu0 %v79
    %v248 = vpop.f32.mrb[0].mxu0
    %v249 = vadd.f32 %v63, %v248
    %v250 = vpop.f32.mrb[0].mxu0
    %251 = vmatprep.mubr.f32.mxu0 0.0
    %252 = vmatmul.mubr.f32.gmra.mrb[0].mxu0 %v82
    %v253 = vpop.f32.mrb[0].mxu0
    %v254 = vadd.f32 %v63, %v253
    %v255 = vpop.f32.mrb[0].mxu0
    %256 = vmatprep.mubr.f32.mxu0 0.0
    %257 = vmatmul.mubr.f32.gmra.mrb[0].mxu0 %v85
    %v258 = vpop.f32.mrb[0].mxu0
    %v259 = vadd.f32 %v63, %v258
    %v260 = vpop.f32.mrb[0].mxu0
    %261 = vmatprep.mubr.f32.mxu0 0.0
    %262 = vmatmul.mubr.f32.gmra.mrb[0].mxu0 %v88
    %v263 = vpop.f32.mrb[0].mxu0
    %v264 = vadd.f32 %v63, %v263
    %v265 = vpop.f32.mrb[0].mxu0
    %266 = vmatprep.mubr.f32.mxu0 0.0
    %267 = vmatmul.mubr.f32.gmra.mrb[0].mxu0 %v91
    %v268 = vpop.f32.mrb[0].mxu0
    %v269 = vadd.f32 %v63, %v268
    %v270 = vpop.f32.mrb[0].mxu0
    %271 = vmatprep.mubr.f32.mxu0 0.0
    %272 = vmatmul.mubr.f32.gmra.mrb[0].mxu0 %v94
    %v273 = vpop.f32.mrb[0].mxu0
    %v274 = vadd.f32 %v63, %v273
    %v275 = vpop.f32.mrb[0].mxu0
    %276 = vmatprep.mubr.f32.mxu0 0.0
    %277 = vmatmul.mubr.f32.gmra.mrb[0].mxu0 %v97
    %v278 = vpop.f32.mrb[0].mxu0
    %v279 = vadd.f32 %v63, %v278
    %v280 = vpop.f32.mrb[0].mxu0
    %281 = vmatprep.mubr.f32.mxu0 0.0
    %282 = vmatmul.mubr.f32.gmra.mrb[0].mxu0 %v100
    %v283 = vpop.f32.mrb[0].mxu0
    %v284 = vadd.f32 %v63, %v283
    %v285 = vpop.f32.mrb[0].mxu0
    %286 = vmatprep.mubr.f32.mxu0 0.0
    %287 = vmatmul.mubr.f32.gmra.mrb[0].mxu0 %v103
    %v288 = vpop.f32.mrb[0].mxu0
    %v289 = vadd.f32 %v63, %v288
    %v290 = vpop.f32.mrb[0].mxu0
    %291 = vmatprep.mubr.f32.mxu0 0.0
    %292 = vmatmul.mubr.f32.gmra.mrb[0].mxu0 %v106
    %v293 = vpop.f32.mrb[0].mxu0
    %v294 = vadd.f32 %v63, %v293
    %v295 = vpop.f32.mrb[0].mxu0
    %296 = vmatprep.mubr.f32.mxu0 0.0
    %297 = vmatmul.mubr.f32.gmra.mrb[0].mxu0 %v109
    %v298 = vpop.f32.mrb[0].mxu0
    %v299 = vadd.f32 %v63, %v298
    %v300 = vpop.f32.mrb[0].mxu0
    %301 = vmatprep.mubr.f32.mxu0 0.0
    %302 = vmatmul.mubr.f32.gmra.mrb[0].mxu0 %v112
    %v303 = vpop.f32.mrb[0].mxu0
    %v304 = vadd.f32 %v63, %v303
    %v305 = vpop.f32.mrb[0].mxu0
    %306 = vmatprep.mubr.f32.mxu0 0.0
    %307 = vmatmul.mubr.f32.gmra.mrb[0].mxu0 %v115
    %v308 = vpop.f32.mrb[0].mxu0
    %v309 = vadd.f32 %v63, %v308
    %v310 = vpop.f32.mrb[0].mxu0
    %311 = vmatprep.mubr.f32.mxu0 0.0
    %312 = vmatmul.mubr.f32.gmra.mrb[0].mxu0 %v118
    %v313 = vpop.f32.mrb[0].mxu0
    %v314 = vadd.f32 %v63, %v313
    %v315 = vpop.f32.mrb[0].mxu0
    %316 = vmatprep.mubr.f32.mxu0 0.0
    %317 = vmatmul.mubr.f32.gmra.mrb[0].mxu0 %v121
    %v318 = vpop.f32.mrb[0].mxu0
    %v319 = vadd.f32 %v63, %v318
    %v320 = vpop.f32.mrb[0].mxu0
    %321 = vmatprep.mubr.f32.mxu0 0.0
    %322 = vmatmul.mubr.f32.gmra.mrb[0].mxu0 %v124
    %v323 = vpop.f32.mrb[0].mxu0
    %v324 = vadd.f32 %v63, %v323
    %v325 = vpop.f32.mrb[0].mxu0
    %326 = vmatprep.mubr.f32.mxu0 0.0
    %327 = vmatmul.mubr.f32.gmra.mrb[0].mxu0 %v127
    %v328 = vpop.f32.mrb[0].mxu0
    %v329 = vadd.f32 %v63, %v328
    %v330 = vpop.f32.mrb[0].mxu0
    %331 = vmatprep.mubr.f32.mxu0 0.0
    %332 = vmatmul.mubr.f32.gmra.mrb[0].mxu0 %v130
    %v333 = vpop.f32.mrb[0].mxu0
    %v334 = vadd.f32 %v63, %v333
    %v335 = vpop.f32.mrb[0].mxu0
    %336 = vmatprep.mubr.f32.mxu0 0.0
    %337 = vmatmul.mubr.f32.gmra.mrb[0].mxu0 %v133
    %v338 = vpop.f32.mrb[0].mxu0
    %v339 = vadd.f32 %v63, %v338
    %v340 = vpop.f32.mrb[0].mxu0
    %341 = vmatprep.mubr.f32.mxu0 0.0
    %342 = vmatmul.mubr.f32.gmra.mrb[0].mxu0 %v136
    %v343 = vpop.f32.mrb[0].mxu0
    %v344 = vadd.f32 %v63, %v343
    %v345 = vpop.f32.mrb[0].mxu0
    %346 = vmatprep.mubr.f32.mxu0 0.0
    %347 = vmatmul.mubr.f32.gmra.mrb[0].mxu0 %v139
    %v348 = vpop.f32.mrb[0].mxu0
    %v349 = vadd.f32 %v63, %v348
    %v350 = vpop.f32.mrb[0].mxu0
    %351 = vmatprep.mubr.f32.mxu0 0.0
    %352 = vmatmul.mubr.f32.gmra.mrb[0].mxu0 %v142
    %v353 = vpop.f32.mrb[0].mxu0
    %v354 = vadd.f32 %v63, %v353
    %v355 = vpop.f32.mrb[0].mxu0
    %356 = vmatprep.mubr.f32.mxu0 0.0
    %357 = vmatmul.mubr.f32.gmra.mrb[0].mxu0 %v145
    %v358 = vpop.f32.mrb[0].mxu0
    %v359 = vadd.f32 %v63, %v358
    %v360 = vpop.f32.mrb[0].mxu0
    %361 = vmatprep.mubr.f32.mxu0 0.0
    %362 = vmatmul.mubr.f32.gmra.mrb[0].mxu0 %v148
    %v363 = vpop.f32.mrb[0].mxu0
    %v364 = vadd.f32 %v63, %v363
    %v365 = vpop.f32.mrb[0].mxu0
    %366 = vmatprep.mubr.f32.mxu0 0.0
    %367 = vmatmul.mubr.f32.gmra.mrb[0].mxu0 %v151
    %v368 = vpop.f32.mrb[0].mxu0
    %v369 = vadd.f32 %v63, %v368
    %v370 = vpop.f32.mrb[0].mxu0
    %371 = vmatprep.mubr.f32.mxu0 0.0
    %372 = vmatmul.mubr.f32.gmra.mrb[0].mxu0 %v154
    %v373 = vpop.f32.mrb[0].mxu0
    %v374 = vadd.f32 %v63, %v373
    %v375 = vpop.f32.mrb[0].mxu0
    %376 = vmatprep.mubr.f32.mxu0 0.0
    %377 = vmatmul.mubr.f32.gmra.mrb[0].mxu0 %v157
    %v378 = vpop.f32.mrb[0].mxu0
    %v379 = vadd.f32 %v63, %v378
    %v380 = vpop.f32.mrb[0].mxu0
    %381 = vmatprep.mubr.f32.mxu0 0.0
    %382 = vmatmul.mubr.f32.gmra.mrb[0].mxu0 %v160
    %v383 = vpop.f32.mrb[0].mxu0
    %v384 = vadd.f32 %v63, %v383
    %v385 = vpop.f32.mrb[0].mxu0
    %386 = vdwg.mxu0
    %v387 = vmax.f32 %v229, 0.0
    %v388 = vmax.f32 %v234, 0.0
    %v389 = vmax.f32 %v239, 0.0
    %v390 = vmax.f32 %v244, 0.0
    %v391 = vmax.f32 %v249, 0.0
    %v392 = vmax.f32 %v254, 0.0
    %v393 = vmax.f32 %v259, 0.0
    %v394 = vmax.f32 %v264, 0.0
    %v395 = vmax.f32 %v269, 0.0
    %v396 = vmax.f32 %v274, 0.0
    %v397 = vmax.f32 %v279, 0.0
    %v398 = vmax.f32 %v284, 0.0
    %v399 = vmax.f32 %v289, 0.0
    %v400 = vmax.f32 %v294, 0.0
    %v401 = vmax.f32 %v299, 0.0
    %v402 = vmax.f32 %v304, 0.0
    %v403 = vmax.f32 %v309, 0.0
    %v404 = vmax.f32 %v314, 0.0
    %v405 = vmax.f32 %v319, 0.0
    %v406 = vmax.f32 %v324, 0.0
    %v407 = vmax.f32 %v329, 0.0
    %v408 = vmax.f32 %v334, 0.0
    %v409 = vmax.f32 %v339, 0.0
    %v410 = vmax.f32 %v344, 0.0
    %v411 = vmax.f32 %v349, 0.0
    %v412 = vmax.f32 %v354, 0.0
    %v413 = vmax.f32 %v359, 0.0
    %v414 = vmax.f32 %v364, 0.0
    %v415 = vmax.f32 %v369, 0.0
    %v416 = vmax.f32 %v374, 0.0
    %v417 = vmax.f32 %v379, 0.0
    %v418 = vmax.f32 %v384, 0.0
    %v419 = vld [vmem:[%s3] sm:$0x1]
    %v421 = vlaneseq
    %v422 = vshrl.u32 %v421, 7
    %v423 = vsub.s32 0, %v422
    %v424 = vrot.slane %v419, %v423
    %v426 = vmul.f32 %v387, %v424
    %v427 = vmul.f32 %v388, %v424
    %v428 = vmul.f32 %v389, %v424
    %v429 = vmul.f32 %v390, %v424
    %v430 = vmul.f32 %v391, %v424
    %v431 = vmul.f32 %v392, %v424
    %v432 = vmul.f32 %v393, %v424
    %v433 = vmul.f32 %v394, %v424
    %v434 = vmul.f32 %v395, %v424
    %v435 = vmul.f32 %v396, %v424
    %v436 = vmul.f32 %v397, %v424
    %v437 = vmul.f32 %v398, %v424
    %v438 = vmul.f32 %v399, %v424
    %v439 = vmul.f32 %v400, %v424
    %v440 = vmul.f32 %v401, %v424
    %v441 = vmul.f32 %v402, %v424
    %v442 = vmul.f32 %v403, %v424
    %v443 = vmul.f32 %v404, %v424
    %v444 = vmul.f32 %v405, %v424
    %v445 = vmul.f32 %v406, %v424
    %v446 = vmul.f32 %v407, %v424
    %v447 = vmul.f32 %v408, %v424
    %v448 = vmul.f32 %v409, %v424
    %v449 = vmul.f32 %v410, %v424
    %v450 = vmul.f32 %v411, %v424
    %v451 = vmul.f32 %v412, %v424
    %v452 = vmul.f32 %v413, %v424
    %v453 = vmul.f32 %v414, %v424
    %v454 = vmul.f32 %v415, %v424
    %v455 = vmul.f32 %v416, %v424
    %v456 = vmul.f32 %v417, %v424
    %v457 = vmul.f32 %v418, %v424
    %s458 = sld [smem:[#allocation2]]
    %459 = vadd.xlane.f32.xlu0 %v426
    %v460 = vpop.xlane.xlu0 %459
    %461 = vadd.xlane.f32.xlu0 %v427
    %v462 = vpop.xlane.xlu0 %461
    %463 = vadd.xlane.f32.xlu0 %v428
    %v464 = vpop.xlane.xlu0 %463
    %465 = vadd.xlane.f32.xlu0 %v429
    %v466 = vpop.xlane.xlu0 %465
    %467 = vadd.xlane.f32.xlu0 %v430
    %v468 = vpop.xlane.xlu0 %467
    %469 = vadd.xlane.f32.xlu0 %v431
    %v470 = vpop.xlane.xlu0 %469
    %471 = vadd.xlane.f32.xlu0 %v432
    %v472 = vpop.xlane.xlu0 %471
    %473 = vadd.xlane.f32.xlu0 %v433
    %v474 = vpop.xlane.xlu0 %473
    %475 = vadd.xlane.f32.xlu0 %v434
    %v476 = vpop.xlane.xlu0 %475
    %477 = vadd.xlane.f32.xlu0 %v435
    %v478 = vpop.xlane.xlu0 %477
    %479 = vadd.xlane.f32.xlu0 %v436
    %v480 = vpop.xlane.xlu0 %479
    %481 = vadd.xlane.f32.xlu0 %v437
    %v482 = vpop.xlane.xlu0 %481
    %483 = vadd.xlane.f32.xlu0 %v438
    %v484 = vpop.xlane.xlu0 %483
    %485 = vadd.xlane.f32.xlu0 %v439
    %v486 = vpop.xlane.xlu0 %485
    %487 = vadd.xlane.f32.xlu0 %v440
    %v488 = vpop.xlane.xlu0 %487
    %489 = vadd.xlane.f32.xlu0 %v441
    %v490 = vpop.xlane.xlu0 %489
    %491 = vadd.xlane.f32.xlu0 %v442
    %v492 = vpop.xlane.xlu0 %491
    %493 = vadd.xlane.f32.xlu0 %v443
    %v494 = vpop.xlane.xlu0 %493
    %495 = vadd.xlane.f32.xlu0 %v444
    %v496 = vpop.xlane.xlu0 %495
    %497 = vadd.xlane.f32.xlu0 %v445
    %v498 = vpop.xlane.xlu0 %497
    %499 = vadd.xlane.f32.xlu0 %v446
    %v500 = vpop.xlane.xlu0 %499
    %501 = vadd.xlane.f32.xlu0 %v447
    %v502 = vpop.xlane.xlu0 %501
    %503 = vadd.xlane.f32.xlu0 %v448
    %v504 = vpop.xlane.xlu0 %503
    %505 = vadd.xlane.f32.xlu0 %v449
    %v506 = vpop.xlane.xlu0 %505
    %507 = vadd.xlane.f32.xlu0 %v450
    %v508 = vpop.xlane.xlu0 %507
    %509 = vadd.xlane.f32.xlu0 %v451
    %v510 = vpop.xlane.xlu0 %509
    %511 = vadd.xlane.f32.xlu0 %v452
    %v512 = vpop.xlane.xlu0 %511
    %513 = vadd.xlane.f32.xlu0 %v453
    %v514 = vpop.xlane.xlu0 %513
    %515 = vadd.xlane.f32.xlu0 %v454
    %v516 = vpop.xlane.xlu0 %515
    %517 = vadd.xlane.f32.xlu0 %v455
    %v518 = vpop.xlane.xlu0 %517
    %519 = vadd.xlane.f32.xlu0 %v456
    %v520 = vpop.xlane.xlu0 %519
    %521 = vadd.xlane.f32.xlu0 %v457
    %v522 = vpop.xlane.xlu0 %521
    %v523 = vstv %s458
    %v524 = vadd.f32 %v460, %v523
    %v525 = vadd.f32 %v462, %v523
    %v526 = vadd.f32 %v464, %v523
    %v527 = vadd.f32 %v466, %v523
    %v528 = vadd.f32 %v468, %v523
    %v529 = vadd.f32 %v470, %v523
    %v530 = vadd.f32 %v472, %v523
    %v531 = vadd.f32 %v474, %v523
    %v532 = vadd.f32 %v476, %v523
    %v533 = vadd.f32 %v478, %v523
    %v534 = vadd.f32 %v480, %v523
    %v535 = vadd.f32 %v482, %v523
    %v536 = vadd.f32 %v484, %v523
    %v537 = vadd.f32 %v486, %v523
    %v538 = vadd.f32 %v488, %v523
    %v539 = vadd.f32 %v490, %v523
    %v540 = vadd.f32 %v492, %v523
    %v541 = vadd.f32 %v494, %v523
    %v542 = vadd.f32 %v496, %v523
    %v543 = vadd.f32 %v498, %v523
    %v544 = vadd.f32 %v500, %v523
    %v545 = vadd.f32 %v502, %v523
    %v546 = vadd.f32 %v504, %v523
    %v547 = vadd.f32 %v506, %v523
    %v548 = vadd.f32 %v508, %v523
    %v549 = vadd.f32 %v510, %v523
    %v550 = vadd.f32 %v512, %v523
    %v551 = vadd.f32 %v514, %v523
    %v552 = vadd.f32 %v516, %v523
    %v553 = vadd.f32 %v518, %v523
    %v554 = vadd.f32 %v520, %v523
    %v555 = vadd.f32 %v522, %v523
    %v572 = vlaneseq
    %v573 = vand.u32 %v572, 127
    %v574 = vlaneseq
    %v575 = vshrl.u32 %v574, 7
    %v576 = vsub.s32 %v573, %v575
    %v577 = vrot.slane %v524, %v576
    %v578 = vadd.s32 %v573, 4294967288
    %v579 = vlaneseq
    %v580 = vshrl.u32 %v579, 7
    %v581 = vsub.s32 %v578, %v580
    %v582 = vrot.slane %v525, %v581
    %vm583 = vcmask 130112
    %v584 = vsel %vm583, %v582, %v577
    %v585 = vadd.s32 %v573, 4294967280
    %v586 = vlaneseq
    %v587 = vshrl.u32 %v586, 7
    %v588 = vsub.s32 %v585, %v587
    %v589 = vrot.slane %v526, %v588
    %vm590 = vcmask 195712
    %v591 = vsel %vm590, %v589, %v584
    %v592 = vadd.s32 %v573, 4294967272
    %v593 = vlaneseq
    %v594 = vshrl.u32 %v593, 7
    %v595 = vsub.s32 %v592, %v594
    %v596 = vrot.slane %v527, %v595
    %vm597 = vcmask 261312
    %v598 = vsel %vm597, %v596, %v591
    %v599 = vadd.s32 %v573, 4294967264
    %v600 = vlaneseq
    %v601 = vshrl.u32 %v600, 7
    %v602 = vsub.s32 %v599, %v601
    %v603 = vrot.slane %v528, %v602
    %vm604 = vcmask 326912
    %v605 = vsel %vm604, %v603, %v598
    %v606 = vadd.s32 %v573, 4294967256
    %v607 = vlaneseq
    %v608 = vshrl.u32 %v607, 7
    %v609 = vsub.s32 %v606, %v608
    %v610 = vrot.slane %v529, %v609
    %vm611 = vcmask 392512
    %v612 = vsel %vm611, %v610, %v605
    %v613 = vadd.s32 %v573, 4294967248
    %v614 = vlaneseq
    %v615 = vshrl.u32 %v614, 7
    %v616 = vsub.s32 %v613, %v615
    %v617 = vrot.slane %v530, %v616
    %vm618 = vcmask 458112
    %v619 = vsel %vm618, %v617, %v612
    %v620 = vadd.s32 %v573, 4294967240
    %v621 = vlaneseq
    %v622 = vshrl.u32 %v621, 7
    %v623 = vsub.s32 %v620, %v622
    %v624 = vrot.slane %v531, %v623
    %vm625 = vcmask 523712
    %v626 = vsel %vm625, %v624, %v619
    %v627 = vadd.s32 %v573, 4294967232
    %v628 = vlaneseq
    %v629 = vshrl.u32 %v628, 7
    %v630 = vsub.s32 %v627, %v629
    %v631 = vrot.slane %v532, %v630
    %vm632 = vcmask 589312
    %v633 = vsel %vm632, %v631, %v626
    %v634 = vadd.s32 %v573, 4294967224
    %v635 = vlaneseq
    %v636 = vshrl.u32 %v635, 7
    %v637 = vsub.s32 %v634, %v636
    %v638 = vrot.slane %v533, %v637
    %vm639 = vcmask 654912
    %v640 = vsel %vm639, %v638, %v633
    %v641 = vadd.s32 %v573, 4294967216
    %v642 = vlaneseq
    %v643 = vshrl.u32 %v642, 7
    %v644 = vsub.s32 %v641, %v643
    %v645 = vrot.slane %v534, %v644
    %vm646 = vcmask 720512
    %v647 = vsel %vm646, %v645, %v640
    %v648 = vadd.s32 %v573, 4294967208
    %v649 = vlaneseq
    %v650 = vshrl.u32 %v649, 7
    %v651 = vsub.s32 %v648, %v650
    %v652 = vrot.slane %v535, %v651
    %vm653 = vcmask 786112
    %v654 = vsel %vm653, %v652, %v647
    %v655 = vadd.s32 %v573, 4294967200
    %v656 = vlaneseq
    %v657 = vshrl.u32 %v656, 7
    %v658 = vsub.s32 %v655, %v657
    %v659 = vrot.slane %v536, %v658
    %vm660 = vcmask 851712
    %v661 = vsel %vm660, %v659, %v654
    %v662 = vadd.s32 %v573, 4294967192
    %v663 = vlaneseq
    %v664 = vshrl.u32 %v663, 7
    %v665 = vsub.s32 %v662, %v664
    %v666 = vrot.slane %v537, %v665
    %vm667 = vcmask 917312
    %v668 = vsel %vm667, %v666, %v661
    %v669 = vadd.s32 %v573, 4294967184
    %v670 = vlaneseq
    %v671 = vshrl.u32 %v670, 7
    %v672 = vsub.s32 %v669, %v671
    %v673 = vrot.slane %v538, %v672
    %vm674 = vcmask 982912
    %v675 = vsel %vm674, %v673, %v668
    %v676 = vadd.s32 %v573, 4294967176
    %v677 = vlaneseq
    %v678 = vshrl.u32 %v677, 7
    %v679 = vsub.s32 %v676, %v678
    %v680 = vrot.slane %v539, %v679
    %vm681 = vcmask 1048512
    %v682 = vsel %vm681, %v680, %v675
    %683 = vst [vmem:[#allocation3] ss:$2 sm:$0x1] %v682
    %v700 = vlaneseq
    %v701 = vshrl.u32 %v700, 7
    %v702 = vsub.s32 %v573, %v701
    %v703 = vrot.slane %v540, %v702
    %v704 = vlaneseq
    %v705 = vshrl.u32 %v704, 7
    %v706 = vsub.s32 %v578, %v705
    %v707 = vrot.slane %v541, %v706
    %v708 = vsel %vm583, %v707, %v703
    %v709 = vlaneseq
    %v710 = vshrl.u32 %v709, 7
    %v711 = vsub.s32 %v585, %v710
    %v712 = vrot.slane %v542, %v711
    %v713 = vsel %vm590, %v712, %v708
    %v714 = vlaneseq
    %v715 = vshrl.u32 %v714, 7
    %v716 = vsub.s32 %v592, %v715
    %v717 = vrot.slane %v543, %v716
    %v718 = vsel %vm597, %v717, %v713
    %v719 = vlaneseq
    %v720 = vshrl.u32 %v719, 7
    %v721 = vsub.s32 %v599, %v720
    %v722 = vrot.slane %v544, %v721
    %v723 = vsel %vm604, %v722, %v718
    %v724 = vlaneseq
    %v725 = vshrl.u32 %v724, 7
    %v726 = vsub.s32 %v606, %v725
    %v727 = vrot.slane %v545, %v726
    %v728 = vsel %vm611, %v727, %v723
    %v729 = vlaneseq
    %v730 = vshrl.u32 %v729, 7
    %v731 = vsub.s32 %v613, %v730
    %v732 = vrot.slane %v546, %v731
    %v733 = vsel %vm618, %v732, %v728
    %v734 = vlaneseq
    %v735 = vshrl.u32 %v734, 7
    %v736 = vsub.s32 %v620, %v735
    %v737 = vrot.slane %v547, %v736
    %v738 = vsel %vm625, %v737, %v733
    %v739 = vlaneseq
    %v740 = vshrl.u32 %v739, 7
    %v741 = vsub.s32 %v627, %v740
    %v742 = vrot.slane %v548, %v741
    %v743 = vsel %vm632, %v742, %v738
    %v744 = vlaneseq
    %v745 = vshrl.u32 %v744, 7
    %v746 = vsub.s32 %v634, %v745
    %v747 = vrot.slane %v549, %v746
    %v748 = vsel %vm639, %v747, %v743
    %v749 = vlaneseq
    %v750 = vshrl.u32 %v749, 7
    %v751 = vsub.s32 %v641, %v750
    %v752 = vrot.slane %v550, %v751
    %v753 = vsel %vm646, %v752, %v748
    %v754 = vlaneseq
    %v755 = vshrl.u32 %v754, 7
    %v756 = vsub.s32 %v648, %v755
    %v757 = vrot.slane %v551, %v756
    %v758 = vsel %vm653, %v757, %v753
    %v759 = vlaneseq
    %v760 = vshrl.u32 %v759, 7
    %v761 = vsub.s32 %v655, %v760
    %v762 = vrot.slane %v552, %v761
    %v763 = vsel %vm660, %v762, %v758
    %v764 = vlaneseq
    %v765 = vshrl.u32 %v764, 7
    %v766 = vsub.s32 %v662, %v765
    %v767 = vrot.slane %v553, %v766
    %v768 = vsel %vm667, %v767, %v763
    %v769 = vlaneseq
    %v770 = vshrl.u32 %v769, 7
    %v771 = vsub.s32 %v669, %v770
    %v772 = vrot.slane %v554, %v771
    %v773 = vsel %vm674, %v772, %v768
    %v774 = vlaneseq
    %v775 = vshrl.u32 %v774, 7
    %v776 = vsub.s32 %v676, %v775
    %v777 = vrot.slane %v555, %v776
    %v778 = vsel %vm681, %v777, %v773
    %s779 = scalar_lea.vmem [#allocation3], 1
    %780 = vst [vmem:[%s779] ss:$2 sm:$0x1] %v778
    // Predicated region
    $region22: #{tpu_custom_call.1} parent=1 // pred_check
      _
    $region23: #{tpu_custom_call.1} parent=1 // pred_check_branch
      %782 = sbr.rel (0) target = $region25
    $region24: #{tpu_custom_call.1} parent=1 // pred_region
      %s784 = ssub.s32 32, 32
      %785 = vsyncadd [#allocation4], %s784
      %s787 = sshll.u32 [#allocation3], 4
      %s788 = int_to_ptr.vmem [resolvable:$true] %s787
      %790 = dma.vmem_to_hbm [thread:$0]  %s788, 32, %s5, [#allocation4]
    $region25: #{tpu_custom_call.1} parent=1 // pred_fallthru
      _
    // Predicated region
    $region26: #{tpu_custom_call.1} parent=1 // pred_check
      _
    $region27: #{tpu_custom_call.1} parent=1 // pred_check_branch
      %792 = sbr.rel (0) target = $region29
    $region28: #{tpu_custom_call.1} parent=1 // pred_region
      %793 = dma.done [#allocation4], 32
    $region29: #{tpu_custom_call.1} parent=1 // pred_fallthru
      _
    %794 = vsyncpa [#allocation4], 1

// kernel: tpu_custom_call.1
$region0: #{tpu_custom_call.1}
  #allocation0 [shape = 'u32[]', space=smem, size = 0x4, offset = 0x4, fixed_abs, tag = 'smem constant byte address 0x4 - core index']
  #allocation1 [shape = 'u32[144,128]{1,0:T(1,128)}', space=vmem, size = 0x12000, scoped, tag = 'internal scratch']
  #allocation2 [shape = 'f32[1,1]{1,0:T(1,128)S(6)}', space=smem, size = 0x200, scoped, tag = 'scoped memory for tpu_custom_call.1']
  %s0 = inlined_call_operand.hbm [shape: f32[8,32], index: 0, kind: input, shape index: {}]
  %s1 = inlined_call_operand.hbm [shape: f32[32,128], index: 1, kind: input, shape index: {}]
  %s2 = inlined_call_operand.vmem [shape: f32[1,128], index: 2, kind: input, shape index: {}]
  %s3 = inlined_call_operand.vmem [shape: f32[1,128], index: 3, kind: input, shape index: {}]
  %s4 = inlined_call_operand.<no memory space> [shape: f32[1,1], index: 4, kind: input, shape index: {}]
  %s5 = inlined_call_operand.vmem [shape: f32[8,1], index: 5, kind: output, shape index: {}]
  %s6 = sld [smem:[#allocation0]]
  $region38: #{tpu_custom_call.1} parent=0
    _
  %s8 = ssub.s32 1, %s6
  %s9 = scalar_select 0, %s8, %s6
  %10 = sst [smem:[#allocation2]] %s4
  $region1: #{tpu_custom_call.1} parent=0
    #allocation3 [shape = 'u8[4096]{0}', space=vmem, size = 0x1000, scoped, tag = 'input window, operand 0, single buffered']
    #allocation4 [shape = 's32[1]{0}', space=sflag, size = 0x4, scoped, tag = 'scoped memory for tpu_custom_call.1']
    #allocation5 [shape = 'u8[16384]{0}', space=vmem, size = 0x4000, scoped, tag = 'input window, operand 1, single buffered']
    #allocation6 [shape = 's32[1]{0}', space=sflag, size = 0x4, scoped, tag = 'scoped memory for tpu_custom_call.1']
    %11 = vsyncpa [#allocation4], 0
    %12 = vsyncpa [#allocation6], 0
    // Predicated region
    $region2: #{tpu_custom_call.1} parent=1 // pred_check
      _
    $region3: #{tpu_custom_call.1} parent=1 // pred_check_branch
      %14 = sbr.rel (0) target = $region5
    $region4: #{tpu_custom_call.1} parent=1 // pred_region
      %s16 = ssub.s32 128, 128
      %17 = vsyncadd [#allocation4], %s16
      %s19 = sshll.u32 [#allocation3], 4
      %s20 = int_to_ptr.vmem [resolvable:$true] %s19
      %22 = dma.hbm_to_vmem [thread:$0]  %s0, 128, %s20, [#allocation4]
    $region5: #{tpu_custom_call.1} parent=1 // pred_fallthru
      _
    // Predicated region
    $region6: #{tpu_custom_call.1} parent=1 // pred_check
      _
    $region7: #{tpu_custom_call.1} parent=1 // pred_check_branch
      %24 = sbr.rel (0) target = $region9
    $region8: #{tpu_custom_call.1} parent=1 // pred_region
      %s26 = ssub.s32 512, 512
      %27 = vsyncadd [#allocation6], %s26
      %s28 = sshll.u32 [#allocation5], 4
      %s29 = int_to_ptr.vmem [resolvable:$true] %s28
      %34 = dma.hbm_to_vmem [thread:$0]  %s1, 512, %s29, [#allocation6], 128, 128, 8
    $region9: #{tpu_custom_call.1} parent=1 // pred_fallthru
      _
    // Predicated region
    $region10: #{tpu_custom_call.1} parent=1 // pred_check
      _
    $region11: #{tpu_custom_call.1} parent=1 // pred_check_branch
      %36 = sbr.rel (0) target = $region13
    $region12: #{tpu_custom_call.1} parent=1 // pred_region
      _
    $region13: #{tpu_custom_call.1} parent=1 // pred_fallthru
      _
    // Predicated region
    $region14: #{tpu_custom_call.1} parent=1 // pred_check
      _
    $region15: #{tpu_custom_call.1} parent=1 // pred_check_branch
      %38 = sbr.rel (0) target = $region17
    $region16: #{tpu_custom_call.1} parent=1 // pred_region
      _
    $region17: #{tpu_custom_call.1} parent=1 // pred_fallthru
      _
    // Predicated region
    $region18: #{tpu_custom_call.1} parent=1 // pred_check
      _
    $region19: #{tpu_custom_call.1} parent=1 // pred_check_branch
      %40 = sbr.rel (0) target = $region21
    $region20: #{tpu_custom_call.1} parent=1 // pred_region
      _
    $region21: #{tpu_custom_call.1} parent=1 // pred_fallthru
      _
    // Predicated region
    $region22: #{tpu_custom_call.1} parent=1 // pred_check
      _
    $region23: #{tpu_custom_call.1} parent=1 // pred_check_branch
      %42 = sbr.rel (0) target = $region25
    $region24: #{tpu_custom_call.1} parent=1 // pred_region
      %43 = dma.done [#allocation4], 128
    $region25: #{tpu_custom_call.1} parent=1 // pred_fallthru
      _
    // Predicated region
    $region26: #{tpu_custom_call.1} parent=1 // pred_check
      _
    $region27: #{tpu_custom_call.1} parent=1 // pred_check_branch
      %45 = sbr.rel (0) target = $region29
    $region28: #{tpu_custom_call.1} parent=1 // pred_region
      %46 = dma.done [#allocation6], 512
    $region29: #{tpu_custom_call.1} parent=1 // pred_fallthru
      _
    %v47 = vld [vmem:[#allocation3] sm:$0xff]
    %v48 = vld [vmem:[#allocation5] sm:$0xff]
    %v49 = vld [vmem:[#allocation5 + $0x8] sm:$0xff]
    %v50 = vld [vmem:[#allocation5 + $0x10] sm:$0xff]
    %v51 = vld [vmem:[#allocation5 + $0x18] sm:$0xff]
    %v52 = vld [vmem:[%s2] sm:$0x1]
    %v54 = vlaneseq
    %v55 = vshrl.u32 %v54, 7
    %v56 = vsub.s32 0, %v55
    %v57 = vrot.slane %v52, %v56
    %vm59 = vcmask 261120
    %v61 = vsel %vm59, %v47, 0
    %63 = vmatprep.subr.mxu0 0.0
    %64 = vmatpush1.msra.mxu0 %v48
    %65 = vmatprep.subr.mxu0 0.0
    %66 = vmatpush1.msra.mxu0 %v49
    %67 = vmatprep.subr.mxu0 0.0
    %68 = vmatpush1.msra.mxu0 %v50
    %69 = vmatprep.subr.mxu0 0.0
    %70 = vmatpush1.msra.mxu0 %v51
    %71 = vmatprep.subr.mxu0 0.0
    %72 = vmatpush1.msra.mxu0 0.0
    %73 = vmatprep.subr.mxu0 0.0
    %74 = vmatpush1.msra.mxu0 0.0
    %75 = vmatprep.subr.mxu0 0.0
    %76 = vmatpush1.msra.mxu0 0.0
    %77 = vmatprep.subr.mxu0 0.0
    %78 = vmatpush1.msra.mxu0 0.0
    %79 = vmatprep.subr.mxu0 0.0
    %80 = vmatpush1.msra.mxu0 0.0
    %81 = vmatprep.subr.mxu0 0.0
    %82 = vmatpush1.msra.mxu0 0.0
    %83 = vmatprep.subr.mxu0 0.0
    %84 = vmatpush1.msra.mxu0 0.0
    %85 = vmatprep.subr.mxu0 0.0
    %86 = vmatpush1.msra.mxu0 0.0
    %87 = vmatprep.subr.mxu0 0.0
    %88 = vmatpush1.msra.mxu0 0.0
    %89 = vmatprep.subr.mxu0 0.0
    %90 = vmatpush1.msra.mxu0 0.0
    %91 = vmatprep.subr.mxu0 0.0
    %92 = vmatpush1.msra.mxu0 0.0
    %93 = vmatprep.subr.mxu0 0.0
    %94 = vmatpush1.msra.mxu0 0.0
    %95 = vmatprep.subr.mxu0 0.0
    %96 = vmatpush1.msra.mxu0 0.0
    %97 = vmatprep.subr.mxu0 0.0
    %98 = vmatpush1.msra.mxu0 0.0
    %99 = vmatprep.subr.mxu0 0.0
    %100 = vmatpush1.msra.mxu0 0.0
    %101 = vmatprep.subr.mxu0 0.0
    %102 = vmatpush1.msra.mxu0 0.0
    %103 = vmatprep.subr.mxu0 0.0
    %104 = vmatpush1.msra.mxu0 0.0
    %105 = vmatprep.subr.mxu0 0.0
    %106 = vmatpush1.msra.mxu0 0.0
    %107 = vmatprep.subr.mxu0 0.0
    %108 = vmatpush1.msra.mxu0 0.0
    %109 = vmatprep.subr.mxu0 0.0
    %110 = vmatpush1.msra.mxu0 0.0
    %111 = vmatprep.subr.mxu0 0.0
    %112 = vmatpush1.msra.mxu0 0.0
    %113 = vmatprep.subr.mxu0 0.0
    %114 = vmatpush1.msra.mxu0 0.0
    %115 = vmatprep.subr.mxu0 0.0
    %116 = vmatpush1.msra.mxu0 0.0
    %117 = vmatprep.subr.mxu0 0.0
    %118 = vmatpush1.msra.mxu0 0.0
    %119 = vmatprep.subr.mxu0 0.0
    %120 = vmatpush1.msra.mxu0 0.0
    %121 = vmatprep.subr.mxu0 0.0
    %122 = vmatpush1.msra.mxu0 0.0
    %123 = vmatprep.subr.mxu0 0.0
    %124 = vmatpush1.msra.mxu0 0.0
    %125 = vmatprep.subr.mxu0 0.0
    %126 = vmatpush1.msra.mxu0 0.0
    %127 = vmatprep.mubr.f32.mxu0 0.0
    %128 = vmatmul.mubr.f32.gmra.mrb[0].mxu0 %v61
    %v129 = vpop.f32.mrb[0].mxu0
    %v130 = vadd.f32 %v57, %v129
    %v131 = vpop.f32.mrb[0].mxu0
    %132 = vdwg.mxu0
    %v133 = vmax.f32 %v130, 0.0
    %v134 = vld [vmem:[%s3] sm:$0x1]
    %v136 = vlaneseq
    %v137 = vshrl.u32 %v136, 7
    %v138 = vsub.s32 0, %v137
    %v139 = vrot.slane %v134, %v138
    %v141 = vmul.f32 %v133, %v139
    %s142 = sld [smem:[#allocation2]]
    %143 = vadd.xlane.f32.xlu0 %v141
    %v144 = vpop.xlane.xlu0 %143
    %v145 = vstv %s142
    %v146 = vadd.f32 %v144, %v145
    %vm147 = vcmask 7168
    %148 = vst.msk [vmem:[%s5] sm:$0xff] %vm147, %v146
    // Predicated region
    $region30: #{tpu_custom_call.1} parent=1 // pred_check
      _
    $region31: #{tpu_custom_call.1} parent=1 // pred_check_branch
      %150 = sbr.rel (0) target = $region33
    $region32: #{tpu_custom_call.1} parent=1 // pred_region
      _
    $region33: #{tpu_custom_call.1} parent=1 // pred_fallthru
      _
    // Predicated region
    $region34: #{tpu_custom_call.1} parent=1 // pred_check
      _
    $region35: #{tpu_custom_call.1} parent=1 // pred_check_branch
      %152 = sbr.rel (0) target = $region37
    $region36: #{tpu_custom_call.1} parent=1 // pred_region
      _
    $region37: #{tpu_custom_call.1} parent=1 // pred_fallthru
      _
    %153 = vsyncpa [#allocation4], 1
    %154 = vsyncpa [#allocation6], 1

</llo_original>
